<compile_context>
chip_gen: v7x
topology: tpu7x:2x2x1
jax: 0.10.0
libtpu: 0.0.40
codegen_flags: <defaults>
</compile_context>

<pallas_src>
import jax
import jax.numpy as jnp
from jax.experimental import pallas as pl
from jax.experimental.pallas import tpu as pltpu


# Kernel is batch-major, one grid step per batch element.
#   px_ref block : (1, 1, Dv)   mean over L of the visual tokens for one batch element
#   w_ref  block : (1, T, Dt)   textual tokens for one batch element
#   wv_ref       : (Dv, Dm)     visual_linear_static_down weight (pre-transposed, x @ W)
#   wt_ref       : (Dt, Dm)     textual_linear_static_down weight
#   w1_ref       : (Dm, Dm//4)  mm_feat_embed_transform[0] weight
#   w2_ref       : (Dm//4, Dm)  mm_feat_embed_transform[2] weight
#   o_ref  block : (1, T, Dm)   output for one batch element
def gf_block_kernel(px_ref, w_ref, wv_ref, wt_ref, w1_ref, w2_ref, o_ref):
    px = px_ref[0]     # (1, Dv)  pooled visual features
    w = w_ref[0]       # (T, Dt)

    # visual_linear_static_down applied to the pooled row only
    # (mean(x) @ Wv == mean(x @ Wv))
    pooled = jnp.dot(px, wv_ref[...], preferred_element_type=jnp.float32)     # (1, Dm)

    # textual_linear_static_down
    wt = jnp.dot(w, wt_ref[...], preferred_element_type=jnp.float32)          # (T, Dm)

    # mm_feat_embed_transform(x + word) -> sigmoid
    s = wt + pooled                                                            # broadcast over T
    h = jnp.maximum(
        jnp.dot(s, w1_ref[...], preferred_element_type=jnp.float32), 0.0)      # (T, Dm//4)
    lam = jax.nn.sigmoid(
        jnp.dot(h, w2_ref[...], preferred_element_type=jnp.float32))           # (T, Dm)

    # mm_embed = word_feat_embed + lamda * x
    o_ref[0] = (wt + lam * pooled).astype(o_ref.dtype)


def gf_block_forward(x_lbd, word_tbd, params):
    """x_lbd: (L, B, Dv), word_tbd: (T, B, Dt) -- PyTorch axis convention. Returns (T, B, Dm)."""
    wv, wt_w, w1, w2 = params
    L, B, Dv = x_lbd.shape
    T, _, Dt = word_tbd.shape
    Dm = wv.shape[1]
    Dh = w1.shape[1]

    # avg_pool1d(kernel=L) == mean over the L visual tokens. Done in the native
    # (L, B, Dv) layout so the only large tensor is streamed once and never
    # transposed / re-materialized in HBM.
    pooled_x = jnp.mean(x_lbd, axis=0)[:, None, :]   # (B, 1, Dv)

    # word_feat is tiny; batch-major transpose costs ~nothing.
    w_btd = jnp.transpose(word_tbd, (1, 0, 2))       # (B, T, Dt)

    out = pl.pallas_call(
        gf_block_kernel,
        out_shape=jax.ShapeDtypeStruct((B, T, Dm), x_lbd.dtype),
        grid=(B,),
        in_specs=[
            pl.BlockSpec((1, 1, Dv), lambda b: (b, 0, 0)),
            pl.BlockSpec((1, T, Dt), lambda b: (b, 0, 0)),
            pl.BlockSpec((Dv, Dm), lambda b: (0, 0)),
            pl.BlockSpec((Dt, Dm), lambda b: (0, 0)),
            pl.BlockSpec((Dm, Dh), lambda b: (0, 0)),
            pl.BlockSpec((Dh, Dm), lambda b: (0, 0)),
        ],
        out_specs=pl.BlockSpec((1, T, Dm), lambda b: (b, 0, 0)),
        compiler_params=pltpu.CompilerParams(dimension_semantics=("parallel",)),
    )(pooled_x, w_btd, wv, wt_w, w1, w2)

    # back to PyTorch (T, B, Dm) convention
    return jnp.transpose(out, (1, 0, 2))


def gf_block_reference(x_lbd, word_tbd, params):
    """Pure-JAX reference mirroring the PyTorch forward (mean AFTER the linear)."""
    wv, wt_w, w1, w2 = params
    x = jnp.einsum('lbd,dm->lbm', x_lbd, wv)                 # visual linear down
    w = jnp.einsum('tbd,dm->tbm', word_tbd, wt_w)            # textual linear down
    x = jnp.mean(x, axis=0, keepdims=True)                   # avg_pool1d over L tokens
    s = x + w
    h = jnp.maximum(jnp.einsum('tbm,mh->tbh', s, w1), 0.0)
    lam = jax.nn.sigmoid(jnp.einsum('tbh,hm->tbm', h, w2))
    return w + lam * x


def init_params(key, d_model=128, d_model_visual=256, d_text=256):
    k1, k2, k3, k4 = jax.random.split(key, 4)
    scale = 0.02
    # weights stored as (in_features, out_features) so kernel does x @ W
    wv = scale * jax.random.normal(k1, (d_model_visual, d_model), jnp.float32)
    wt_w = scale * jax.random.normal(k2, (d_text, d_model), jnp.float32)
    w1 = scale * jax.random.normal(k3, (d_model, d_model // 4), jnp.float32)
    w2 = scale * jax.random.normal(k4, (d_model // 4, d_model), jnp.float32)
    return wv, wt_w, w1, w2


if __name__ == "__main__":
    key = jax.random.PRNGKey(0)
    kx, kw, kp = jax.random.split(key, 3)

    d_model, d_model_visual, d_text = 128, 256, 256
    L, B, T = 400, 2, 4   # L=400 matches the hard-coded avg_pool1d kernel size

    x = jax.random.normal(kx, (L, B, d_model_visual), jnp.float32)
    word_feat_embed = jax.random.normal(kw, (T, B, d_text), jnp.float32)
    params = init_params(kp, d_model, d_model_visual, d_text)

    fwd = jax.jit(gf_block_forward)
    out = jax.block_until_ready(fwd(x, word_feat_embed, params))

    ref = jax.block_until_ready(gf_block_reference(x, word_feat_embed, params))
    assert out.shape == (T, B, d_model), out.shape
    assert jnp.allclose(out, ref, rtol=1e-2, atol=1e-2), float(jnp.max(jnp.abs(out - ref)))

    print("KERNEL_OK")
</pallas_src>

<mosaic_0001>
module attributes {stable_mosaic.version = 11 : i64} {
  func.func @gf_block_kernel(%arg0: i32, %arg1: memref<1x1x256xf32, #tpu.memory_space<vmem>>, %arg2: memref<1x4x256xf32, #tpu.memory_space<vmem>>, %arg3: memref<256x128xf32, #tpu.memory_space<vmem>>, %arg4: memref<256x128xf32, #tpu.memory_space<vmem>>, %arg5: memref<128x32xf32, #tpu.memory_space<vmem>>, %arg6: memref<32x128xf32, #tpu.memory_space<vmem>>, %arg7: memref<1x4x128xf32, #tpu.memory_space<vmem>>) attributes {dimension_semantics = [#tpu.dimension_semantics<parallel>], iteration_bounds = array<i64: 2>, scalar_prefetch = 0 : i64, scratch_operands = 0 : i64, tpu.core_type = #tpu.core_type<tc>, window_params = [{transform_indices = @transform_0, window_bounds = array<i64: 1, 1, 256>}, {transform_indices = @transform_1, window_bounds = array<i64: 1, 4, 256>}, {pipeline_mode = #tpu.pipeline_mode<synchronous>, transform_indices = @transform_2, window_bounds = array<i64: 256, 128>}, {pipeline_mode = #tpu.pipeline_mode<synchronous>, transform_indices = @transform_3, window_bounds = array<i64: 256, 128>}, {pipeline_mode = #tpu.pipeline_mode<synchronous>, transform_indices = @transform_4, window_bounds = array<i64: 128, 32>}, {pipeline_mode = #tpu.pipeline_mode<synchronous>, transform_indices = @transform_5, window_bounds = array<i64: 32, 128>}, {transform_indices = @transform_6, window_bounds = array<i64: 1, 4, 128>}]} {
    %c0 = arith.constant 0 : index
    %c0_0 = arith.constant 0 : index
    %c0_1 = arith.constant 0 : index
    %0 = vector.load %arg1[%c0, %c0_0, %c0_1] : memref<1x1x256xf32, #tpu.memory_space<vmem>>, vector<1x1x256xf32>
    %1 = vector.shape_cast %0 : vector<1x1x256xf32> to vector<1x256xf32>
    %c0_2 = arith.constant 0 : index
    %c0_3 = arith.constant 0 : index
    %c0_4 = arith.constant 0 : index
    %2 = vector.load %arg2[%c0_2, %c0_3, %c0_4] : memref<1x4x256xf32, #tpu.memory_space<vmem>>, vector<1x4x256xf32>
    %3 = vector.shape_cast %2 : vector<1x4x256xf32> to vector<4x256xf32>
    %c0_5 = arith.constant 0 : index
    %c0_6 = arith.constant 0 : index
    %4 = vector.load %arg3[%c0_5, %c0_6] : memref<256x128xf32, #tpu.memory_space<vmem>>, vector<256x128xf32>
    %cst = arith.constant dense<0.000000e+00> : vector<1x128xf32>
    %5 = tpu.matmul %1, %4, %cst {dimension_numbers = #tpu.dot_dimension_numbers<[1], [0], [0], [1], [0, 0, 1, 1], [], []>} : vector<1x256xf32>, vector<256x128xf32>, vector<1x128xf32> -> vector<1x128xf32>
    %c0_7 = arith.constant 0 : index
    %c0_8 = arith.constant 0 : index
    %6 = vector.load %arg4[%c0_7, %c0_8] : memref<256x128xf32, #tpu.memory_space<vmem>>, vector<256x128xf32>
    %cst_9 = arith.constant dense<0.000000e+00> : vector<4x128xf32>
    %7 = tpu.matmul %3, %6, %cst_9 {dimension_numbers = #tpu.dot_dimension_numbers<[1], [0], [0], [1], [0, 0, 1, 1], [], []>} : vector<4x256xf32>, vector<256x128xf32>, vector<4x128xf32> -> vector<4x128xf32>
    %8 = vector.broadcast %5 : vector<1x128xf32> to vector<4x128xf32>
    %9 = arith.addf %7, %8 : vector<4x128xf32>
    %c0_10 = arith.constant 0 : index
    %c0_11 = arith.constant 0 : index
    %10 = vector.load %arg5[%c0_10, %c0_11] : memref<128x32xf32, #tpu.memory_space<vmem>>, vector<128x32xf32>
    %cst_12 = arith.constant dense<0.000000e+00> : vector<4x32xf32>
    %11 = tpu.matmul %9, %10, %cst_12 {dimension_numbers = #tpu.dot_dimension_numbers<[1], [0], [0], [1], [0, 0, 1, 1], [], []>} : vector<4x128xf32>, vector<128x32xf32>, vector<4x32xf32> -> vector<4x32xf32>
    %cst_13 = arith.constant 0.000000e+00 : f32
    %12 = vector.broadcast %cst_13 : f32 to vector<4x32xf32>
    %13 = arith.maximumf %11, %12 : vector<4x32xf32>
    %c0_14 = arith.constant 0 : index
    %c0_15 = arith.constant 0 : index
    %14 = vector.load %arg6[%c0_14, %c0_15] : memref<32x128xf32, #tpu.memory_space<vmem>>, vector<32x128xf32>
    %cst_16 = arith.constant dense<0.000000e+00> : vector<4x128xf32>
    %15 = tpu.matmul %13, %14, %cst_16 {dimension_numbers = #tpu.dot_dimension_numbers<[1], [0], [0], [1], [0, 0, 1, 1], [], []>} : vector<4x32xf32>, vector<32x128xf32>, vector<4x128xf32> -> vector<4x128xf32>
    %16 = arith.negf %15 : vector<4x128xf32>
    %17 = math.exp %16 : vector<4x128xf32>
    %cst_17 = arith.constant 1.000000e+00 : f32
    %18 = vector.broadcast %cst_17 : f32 to vector<4x128xf32>
    %19 = arith.addf %18, %17 : vector<4x128xf32>
    %20 = arith.divf %18, %19 : vector<4x128xf32>
    %21 = vector.broadcast %5 : vector<1x128xf32> to vector<4x128xf32>
    %22 = arith.mulf %20, %21 : vector<4x128xf32>
    %23 = arith.addf %7, %22 : vector<4x128xf32>
    %c0_18 = arith.constant 0 : index
    %c0_19 = arith.constant 0 : index
    %c0_20 = arith.constant 0 : index
    %24 = vector.load %arg7[%c0_18, %c0_19, %c0_20] : memref<1x4x128xf32, #tpu.memory_space<vmem>>, vector<1x4x128xf32>
    %25 = vector.shape_cast %24 : vector<1x4x128xf32> to vector<4x128xf32>
    %26 = vector.shape_cast %23 : vector<4x128xf32> to vector<1x4x128xf32>
    tpu.vector_store %arg7[%c0_18, %c0_19, %c0_20], %26 {strides = array<i32>} : memref<1x4x128xf32, #tpu.memory_space<vmem>>, vector<1x4x128xf32>,
    return
  }
  func.func @transform_0(%arg0: i32) -> (i32, i32, i32) {
    %c0_i32 = arith.constant 0 : i32
    %c0_i32_0 = arith.constant 0 : i32
    %c0_i32_1 = arith.constant 0 : i32
    return %arg0, %c0_i32, %c0_i32_0 : i32, i32, i32
  }
  func.func @transform_1(%arg0: i32) -> (i32, i32, i32) {
    %c0_i32 = arith.constant 0 : i32
    %c0_i32_0 = arith.constant 0 : i32
    %c0_i32_1 = arith.constant 0 : i32
    return %arg0, %c0_i32, %c0_i32_0 : i32, i32, i32
  }
  func.func @transform_2(%arg0: i32) -> (i32, i32) {
    %c0_i32 = arith.constant 0 : i32
    %c0_i32_0 = arith.constant 0 : i32
    %c0_i32_1 = arith.constant 0 : i32
    return %c0_i32, %c0_i32_0 : i32, i32
  }
  func.func @transform_3(%arg0: i32) -> (i32, i32) {
    %c0_i32 = arith.constant 0 : i32
    %c0_i32_0 = arith.constant 0 : i32
    %c0_i32_1 = arith.constant 0 : i32
    return %c0_i32, %c0_i32_0 : i32, i32
  }
  func.func @transform_4(%arg0: i32) -> (i32, i32) {
    %c0_i32 = arith.constant 0 : i32
    %c0_i32_0 = arith.constant 0 : i32
    %c0_i32_1 = arith.constant 0 : i32
    return %c0_i32, %c0_i32_0 : i32, i32
  }
  func.func @transform_5(%arg0: i32) -> (i32, i32) {
    %c0_i32 = arith.constant 0 : i32
    %c0_i32_0 = arith.constant 0 : i32
    %c0_i32_1 = arith.constant 0 : i32
    return %c0_i32, %c0_i32_0 : i32, i32
  }
  func.func @transform_6(%arg0: i32) -> (i32, i32, i32) {
    %c0_i32 = arith.constant 0 : i32
    %c0_i32_0 = arith.constant 0 : i32
    %c0_i32_1 = arith.constant 0 : i32
    return %arg0, %c0_i32, %c0_i32_0 : i32, i32, i32
  }
}

</mosaic_0001>

<llo_original>
// kernel: gf_block_forward.1
$region0: #{gf_block_forward.1}
  #allocation0 [shape = 'u32[]', space=smem, size = 0x4, offset = 0x4, fixed_abs, tag = 'smem constant byte address 0x4 - core index']
  #allocation1 [shape = 'u32[144,128]{1,0:T(1,128)}', space=vmem, size = 0x12000, scoped, tag = 'internal scratch']
  %s0 = inlined_call_operand.vmem [shape: f32[2,1,256], index: 0, kind: input, shape index: {}]
  %s1 = inlined_call_operand.vmem [shape: f32[2,4,256], index: 1, kind: input, shape index: {}]
  %s2 = inlined_call_operand.vmem [shape: f32[256,128], index: 2, kind: input, shape index: {}]
  %s3 = inlined_call_operand.vmem [shape: f32[256,128], index: 3, kind: input, shape index: {}]
  %s4 = inlined_call_operand.vmem [shape: f32[128,32], index: 4, kind: input, shape index: {}]
  %s5 = inlined_call_operand.vmem [shape: f32[32,128], index: 5, kind: input, shape index: {}]
  %s6 = inlined_call_operand.vmem [shape: f32[2,4,128], index: 6, kind: output, shape index: {}]
  %s7 = sld [smem:[#allocation0]]
  $region57: #{gf_block_forward.1} parent=0
    _
  %s9 = ssub.s32 1, %s7
  %s10 = scalar_select 0, %s9, %s7
  loop: start=0, step=1, limit=4
  $region2: #{gf_block_forward.1} parent=0 // loop_pre_header
    _
  $region3: #{gf_block_forward.1} parent=0 // loop_header
    %s12 = sphi 0, %s16
    %p13 = scmp.ge.s32.totalorder %s12, 4
    %s22 = sphi 0, %s24
    %s25 = sphi 0, %s22
    %s26 = sphi 0, %s25
    %s42 = sphi 0, %s26
    %s48 = sphi 0, %s50
    %s51 = sphi 0, %s48
    %s52 = sphi 0, %s51
    %s68 = sphi 0, %s52
    %s72 = sphi 0, %s72
    %s74 = sphi 0, %s72
    %s75 = sphi 0, %s74
    %s89 = sphi 0, %s75
    %s93 = sphi 0, %s93
    %s95 = sphi 0, %s93
    %s96 = sphi 0, %s95
    %s110 = sphi 0, %s96
    %s114 = sphi 0, %s114
    %s116 = sphi 0, %s114
    %s117 = sphi 0, %s116
    %s131 = sphi 0, %s117
    %s135 = sphi 0, %s135
    %s137 = sphi 0, %s135
    %s138 = sphi 0, %s137
    %s152 = sphi 0, %s138
    %s158 = sphi 0, %s160
    %s161 = sphi 0, %s158
    %s162 = sphi 0, %s161
    %s178 = sphi 0, %s162
  $region4: #{gf_block_forward.1} parent=0 // loop_header_branch
    %15 = sbr.rel (%p13) target = $region8
  $region5: #{gf_block_forward.1} parent=0 // loop_body
    %s17 = ssub.s32 %s12, 1
    %s18 = ssub.s32 %s12, 2
    %s19 = sadd.s32 %s12, 1
    %s20 = ssub.s32 %s12, %s19
    %p21 = scmp.eq.s32.totalorder %s20, 0
    %s23 = sadd.s32 %s22, 1
    %s24 = scalar_select %p21, %s22, %s23
    %p27 = pneg %p21
    %p28 = scmp.eq.s32.totalorder %s12, 1
    %p29 = por %p27, %p28
    %p30 = scmp.ne.s32.totalorder %s22, %s25
    %p31 = scmp.eq.s32.totalorder %s12, 0
    %p32 = por %p30, %p31
    %p33 = scmp.ne.s32.totalorder %s22, %s25
    %p34 = scmp.eq.s32.totalorder %s17, 1
    %p35 = por %p33, %p34
    %p36 = scmp.ne.s32.totalorder %s25, %s26
    %p37 = scmp.eq.s32.totalorder %s17, 0
    %p38 = por %p36, %p37
    %p39 = scmp.ne.s32.totalorder %s25, %s26
    %p40 = scmp.eq.s32.totalorder %s18, 1
    %p41 = por %p39, %p40
    %p43 = scmp.ne.s32.totalorder %s26, %s42
    %p44 = scmp.eq.s32.totalorder %s18, 0
    %p45 = por %p43, %p44
    %s46 = ssub.s32 %s12, %s19
    %p47 = scmp.eq.s32.totalorder %s46, 0
    %s49 = sadd.s32 %s48, 1
    %s50 = scalar_select %p47, %s48, %s49
    %p53 = pneg %p47
    %p54 = scmp.eq.s32.totalorder %s12, 1
    %p55 = por %p53, %p54
    %p56 = scmp.ne.s32.totalorder %s48, %s51
    %p57 = scmp.eq.s32.totalorder %s12, 0
    %p58 = por %p56, %p57
    %p59 = scmp.ne.s32.totalorder %s48, %s51
    %p60 = scmp.eq.s32.totalorder %s17, 1
    %p61 = por %p59, %p60
    %p62 = scmp.ne.s32.totalorder %s51, %s52
    %p63 = scmp.eq.s32.totalorder %s17, 0
    %p64 = por %p62, %p63
    %p65 = scmp.ne.s32.totalorder %s51, %s52
    %p66 = scmp.eq.s32.totalorder %s18, 1
    %p67 = por %p65, %p66
    %p69 = scmp.ne.s32.totalorder %s52, %s68
    %p70 = scmp.eq.s32.totalorder %s18, 0
    %p71 = por %p69, %p70
    %s73 = sadd.s32 %s72, 1
    %p76 = scmp.eq.s32.totalorder %s12, 1
    %p77 = scmp.ne.s32.totalorder %s72, %s74
    %p78 = scmp.eq.s32.totalorder %s12, 0
    %p79 = por %p77, %p78
    %p80 = scmp.ne.s32.totalorder %s72, %s74
    %p81 = scmp.eq.s32.totalorder %s17, 1
    %p82 = por %p80, %p81
    %p83 = scmp.ne.s32.totalorder %s74, %s75
    %p84 = scmp.eq.s32.totalorder %s17, 0
    %p85 = por %p83, %p84
    %p86 = scmp.ne.s32.totalorder %s74, %s75
    %p87 = scmp.eq.s32.totalorder %s18, 1
    %p88 = por %p86, %p87
    %p90 = scmp.ne.s32.totalorder %s75, %s89
    %p91 = scmp.eq.s32.totalorder %s18, 0
    %p92 = por %p90, %p91
    %s94 = sadd.s32 %s93, 1
    %p97 = scmp.eq.s32.totalorder %s12, 1
    %p98 = scmp.ne.s32.totalorder %s93, %s95
    %p99 = scmp.eq.s32.totalorder %s12, 0
    %p100 = por %p98, %p99
    %p101 = scmp.ne.s32.totalorder %s93, %s95
    %p102 = scmp.eq.s32.totalorder %s17, 1
    %p103 = por %p101, %p102
    %p104 = scmp.ne.s32.totalorder %s95, %s96
    %p105 = scmp.eq.s32.totalorder %s17, 0
    %p106 = por %p104, %p105
    %p107 = scmp.ne.s32.totalorder %s95, %s96
    %p108 = scmp.eq.s32.totalorder %s18, 1
    %p109 = por %p107, %p108
    %p111 = scmp.ne.s32.totalorder %s96, %s110
    %p112 = scmp.eq.s32.totalorder %s18, 0
    %p113 = por %p111, %p112
    %s115 = sadd.s32 %s114, 1
    %p118 = scmp.eq.s32.totalorder %s12, 1
    %p119 = scmp.ne.s32.totalorder %s114, %s116
    %p120 = scmp.eq.s32.totalorder %s12, 0
    %p121 = por %p119, %p120
    %p122 = scmp.ne.s32.totalorder %s114, %s116
    %p123 = scmp.eq.s32.totalorder %s17, 1
    %p124 = por %p122, %p123
    %p125 = scmp.ne.s32.totalorder %s116, %s117
    %p126 = scmp.eq.s32.totalorder %s17, 0
    %p127 = por %p125, %p126
    %p128 = scmp.ne.s32.totalorder %s116, %s117
    %p129 = scmp.eq.s32.totalorder %s18, 1
    %p130 = por %p128, %p129
    %p132 = scmp.ne.s32.totalorder %s117, %s131
    %p133 = scmp.eq.s32.totalorder %s18, 0
    %p134 = por %p132, %p133
    %s136 = sadd.s32 %s135, 1
    %p139 = scmp.eq.s32.totalorder %s12, 1
    %p140 = scmp.ne.s32.totalorder %s135, %s137
    %p141 = scmp.eq.s32.totalorder %s12, 0
    %p142 = por %p140, %p141
    %p143 = scmp.ne.s32.totalorder %s135, %s137
    %p144 = scmp.eq.s32.totalorder %s17, 1
    %p145 = por %p143, %p144
    %p146 = scmp.ne.s32.totalorder %s137, %s138
    %p147 = scmp.eq.s32.totalorder %s17, 0
    %p148 = por %p146, %p147
    %p149 = scmp.ne.s32.totalorder %s137, %s138
    %p150 = scmp.eq.s32.totalorder %s18, 1
    %p151 = por %p149, %p150
    %p153 = scmp.ne.s32.totalorder %s138, %s152
    %p154 = scmp.eq.s32.totalorder %s18, 0
    %p155 = por %p153, %p154
    %s156 = ssub.s32 %s12, %s19
    %p157 = scmp.eq.s32.totalorder %s156, 0
    %s159 = sadd.s32 %s158, 1
    %s160 = scalar_select %p157, %s158, %s159
    %p163 = pneg %p157
    %p164 = scmp.eq.s32.totalorder %s12, 1
    %p165 = por %p163, %p164
    %p166 = scmp.ne.s32.totalorder %s158, %s161
    %p167 = scmp.eq.s32.totalorder %s12, 0
    %p168 = por %p166, %p167
    %p169 = scmp.ne.s32.totalorder %s158, %s161
    %p170 = scmp.eq.s32.totalorder %s17, 1
    %p171 = por %p169, %p170
    %p172 = scmp.ne.s32.totalorder %s161, %s162
    %p173 = scmp.eq.s32.totalorder %s17, 0
    %p174 = por %p172, %p173
    %p175 = scmp.ne.s32.totalorder %s161, %s162
    %p176 = scmp.eq.s32.totalorder %s18, 1
    %p177 = por %p175, %p176
    %p179 = scmp.ne.s32.totalorder %s162, %s178
    %p180 = scmp.eq.s32.totalorder %s18, 0
    %p181 = por %p179, %p180
    %p182 = scmp.le.s32.totalorder 1, %s12
    %p183 = scmp.lt.s32.totalorder %s12, 3
    %p184 = pnand %p182, %p183
    %p185 = pneg %p184
    // Predicated region
    $region9: #{gf_block_forward.1} parent=5 // pred_check
      _
    $region10: #{gf_block_forward.1} parent=5 // pred_check_branch
      %187 = sbr.rel (%p184) target = $region12
    $region11: #{gf_block_forward.1} parent=5 // pred_region
      %s188 = ssub.s32 %s12, 1
      // Predicated region
      $region13: #{gf_block_forward.1} parent=11 // pred_check
        %p189 = pneg %p85
      $region14: #{gf_block_forward.1} parent=11 // pred_check_branch
        %191 = sbr.rel (%p189) target = $region16
      $region15: #{gf_block_forward.1} parent=11 // pred_region
        _
      $region16: #{gf_block_forward.1} parent=11 // pred_fallthru
        _
      // Predicated region
      $region17: #{gf_block_forward.1} parent=11 // pred_check
        %p192 = pneg %p106
      $region18: #{gf_block_forward.1} parent=11 // pred_check_branch
        %194 = sbr.rel (%p192) target = $region20
      $region19: #{gf_block_forward.1} parent=11 // pred_region
        _
      $region20: #{gf_block_forward.1} parent=11 // pred_fallthru
        _
      // Predicated region
      $region21: #{gf_block_forward.1} parent=11 // pred_check
        %p195 = pneg %p127
      $region22: #{gf_block_forward.1} parent=11 // pred_check_branch
        %197 = sbr.rel (%p195) target = $region24
      $region23: #{gf_block_forward.1} parent=11 // pred_region
        _
      $region24: #{gf_block_forward.1} parent=11 // pred_fallthru
        _
      // Predicated region
      $region25: #{gf_block_forward.1} parent=11 // pred_check
        %p198 = pneg %p148
      $region26: #{gf_block_forward.1} parent=11 // pred_check_branch
        %200 = sbr.rel (%p198) target = $region28
      $region27: #{gf_block_forward.1} parent=11 // pred_region
        _
      $region28: #{gf_block_forward.1} parent=11 // pred_fallthru
        _
    $region12: #{gf_block_forward.1} parent=5 // pred_fallthru
      _
    %p201 = scmp.lt.s32.totalorder %s12, 2
    // Predicated region
    $region29: #{gf_block_forward.1} parent=5 // pred_check
      %p202 = pneg %p201
    $region30: #{gf_block_forward.1} parent=5 // pred_check_branch
      %204 = sbr.rel (%p202) target = $region32
    $region31: #{gf_block_forward.1} parent=5 // pred_region
      // Predicated region
      $region33: #{gf_block_forward.1} parent=31 // pred_check
        %p205 = pneg %p32
      $region34: #{gf_block_forward.1} parent=31 // pred_check_branch
        %207 = sbr.rel (%p205) target = $region36
      $region35: #{gf_block_forward.1} parent=31 // pred_region
        %p208 = scmp.lt.s32.totalorder %s12, 1
        %s209 = scalar_select %p208, %s12, 1
        %s210 = smul.addr %s209, 2
        %s211 = scalar_lea.vmem %s0, %s210
      $region36: #{gf_block_forward.1} parent=31 // pred_fallthru
        _
      // Predicated region
      $region37: #{gf_block_forward.1} parent=31 // pred_check
        %p212 = pneg %p58
      $region38: #{gf_block_forward.1} parent=31 // pred_check_branch
        %214 = sbr.rel (%p212) target = $region40
      $region39: #{gf_block_forward.1} parent=31 // pred_region
        %p215 = scmp.lt.s32.totalorder %s12, 1
        %s216 = scalar_select %p215, %s12, 1
        %s217 = smul.addr %s216, 2
        %s218 = smul.addr %s217, 4
        %s219 = scalar_lea.vmem %s1, %s218
      $region40: #{gf_block_forward.1} parent=31 // pred_fallthru
        _
    $region32: #{gf_block_forward.1} parent=5 // pred_fallthru
      _
    %p220 = scmp.le.s32.totalorder 1, %s12
    %p221 = scmp.lt.s32.totalorder %s12, 3
    %p222 = pnand %p220, %p221
    %p223 = pneg %p222
    // Predicated region
    $region41: #{gf_block_forward.1} parent=5 // pred_check
      _
    $region42: #{gf_block_forward.1} parent=5 // pred_check_branch
      %225 = sbr.rel (%p222) target = $region44
    $region43: #{gf_block_forward.1} parent=5 // pred_region
      %s226 = ssub.s32 %s12, 1
      %p227 = scmp.lt.s32.totalorder %s17, 1
      %s228 = scalar_select %p227, %s17, 1
      %s229 = smul.addr %s228, 2
      %s230 = scalar_lea.vmem %s0, %s229
      %p231 = pneg %p38
      %p232 = pneg %p35
      %p233 = scmp.lt.s32.totalorder %s17, 1
      %s234 = scalar_select %p233, %s17, 1
      %s235 = smul.addr %s234, 2
      %s236 = smul.addr %s235, 4
      %s237 = scalar_lea.vmem %s1, %s236
      %p238 = pneg %p64
      %p239 = pneg %p61
      %p240 = pneg %p85
      %p241 = pneg %p82
      %p242 = pneg %p106
      %p243 = pneg %p103
      %p244 = pneg %p127
      %p245 = pneg %p124
      %p246 = pneg %p148
      %p247 = pneg %p145
      %p248 = pneg %p174
      %p249 = pneg %p171
      %p250 = scmp.lt.s32.totalorder %s17, 1
      %s251 = scalar_select %p250, %s17, 1
      %s252 = smul.addr %s251, 4
      %s253 = scalar_lea.vmem %s6, %s252
      %p254 = scmp.lt.s32.totalorder %s17, 1
      %s255 = scalar_select %p254, %s17, 1
      %s256 = smul.addr %s255, 2
      %s257 = scalar_lea.vmem %s0, %s256
      %p258 = scmp.lt.s32.totalorder %s17, 1
      %s259 = scalar_select %p258, %s17, 1
      %s260 = smul.addr %s259, 2
      %s261 = smul.addr %s260, 4
      %s262 = scalar_lea.vmem %s1, %s261
      %p263 = scmp.lt.s32.totalorder %s17, 1
      %s264 = scalar_select %p263, %s17, 1
      %s265 = smul.addr %s264, 4
      %s266 = scalar_lea.vmem %s6, %s265
      %v267 = vld [vmem:[%s257] sm:$0x3]
      %v268 = vld [vmem:[%s262] sm:$0xff]
      %v269 = vld [vmem:[%s2] sm:$0xff]
      %v270 = vld [vmem:[%s2 + $0x8] sm:$0xff]
      %v271 = vld [vmem:[%s2 + $0x10] sm:$0xff]
      %v272 = vld [vmem:[%s2 + $0x18] sm:$0xff]
      %v273 = vld [vmem:[%s2 + $0x20] sm:$0xff]
      %v274 = vld [vmem:[%s2 + $0x28] sm:$0xff]
      %v275 = vld [vmem:[%s2 + $0x30] sm:$0xff]
      %v276 = vld [vmem:[%s2 + $0x38] sm:$0xff]
      %v277 = vld [vmem:[%s2 + $0x40] sm:$0xff]
      %v278 = vld [vmem:[%s2 + $0x48] sm:$0xff]
      %v279 = vld [vmem:[%s2 + $0x50] sm:$0xff]
      %v280 = vld [vmem:[%s2 + $0x58] sm:$0xff]
      %v281 = vld [vmem:[%s2 + $0x60] sm:$0xff]
      %v282 = vld [vmem:[%s2 + $0x68] sm:$0xff]
      %v283 = vld [vmem:[%s2 + $0x70] sm:$0xff]
      %v284 = vld [vmem:[%s2 + $0x78] sm:$0xff]
      %v285 = vld [vmem:[%s2 + $0x80] sm:$0xff]
      %v286 = vld [vmem:[%s2 + $0x88] sm:$0xff]
      %v287 = vld [vmem:[%s2 + $0x90] sm:$0xff]
      %v288 = vld [vmem:[%s2 + $0x98] sm:$0xff]
      %v289 = vld [vmem:[%s2 + $0xa0] sm:$0xff]
      %v290 = vld [vmem:[%s2 + $0xa8] sm:$0xff]
      %v291 = vld [vmem:[%s2 + $0xb0] sm:$0xff]
      %v292 = vld [vmem:[%s2 + $0xb8] sm:$0xff]
      %v293 = vld [vmem:[%s2 + $0xc0] sm:$0xff]
      %v294 = vld [vmem:[%s2 + $0xc8] sm:$0xff]
      %v295 = vld [vmem:[%s2 + $0xd0] sm:$0xff]
      %v296 = vld [vmem:[%s2 + $0xd8] sm:$0xff]
      %v297 = vld [vmem:[%s2 + $0xe0] sm:$0xff]
      %v298 = vld [vmem:[%s2 + $0xe8] sm:$0xff]
      %v299 = vld [vmem:[%s2 + $0xf0] sm:$0xff]
      %v300 = vld [vmem:[%s2 + $0xf8] sm:$0xff]
      %v302 = vlaneseq
      %v303 = vshrl.u32 %v302, 7
      %v304 = vsub.s32 0, %v303
      %v305 = vrot.slane %v267, %v304
      %v306 = vlaneseq
      %v307 = vshrl.u32 %v306, 7
      %v308 = vsub.s32 1, %v307
      %v309 = vrot.slane %v267, %v308
      %312 = vmatprep.subr.mxu0 0.0
      %313 = vmatpush1.msra.mxu0 %v269
      %314 = vmatprep.subr.mxu0 0.0
      %315 = vmatpush1.msra.mxu0 %v270
      %316 = vmatprep.subr.mxu0 0.0
      %317 = vmatpush1.msra.mxu0 %v271
      %318 = vmatprep.subr.mxu0 0.0
      %319 = vmatpush1.msra.mxu0 %v272
      %320 = vmatprep.subr.mxu0 0.0
      %321 = vmatpush1.msra.mxu0 %v273
      %322 = vmatprep.subr.mxu0 0.0
      %323 = vmatpush1.msra.mxu0 %v274
      %324 = vmatprep.subr.mxu0 0.0
      %325 = vmatpush1.msra.mxu0 %v275
      %326 = vmatprep.subr.mxu0 0.0
      %327 = vmatpush1.msra.mxu0 %v276
      %328 = vmatprep.subr.mxu0 0.0
      %329 = vmatpush1.msra.mxu0 %v277
      %330 = vmatprep.subr.mxu0 0.0
      %331 = vmatpush1.msra.mxu0 %v278
      %332 = vmatprep.subr.mxu0 0.0
      %333 = vmatpush1.msra.mxu0 %v279
      %334 = vmatprep.subr.mxu0 0.0
      %335 = vmatpush1.msra.mxu0 %v280
      %336 = vmatprep.subr.mxu0 0.0
      %337 = vmatpush1.msra.mxu0 %v281
      %338 = vmatprep.subr.mxu0 0.0
      %339 = vmatpush1.msra.mxu0 %v282
      %340 = vmatprep.subr.mxu0 0.0
      %341 = vmatpush1.msra.mxu0 %v283
      %342 = vmatprep.subr.mxu0 0.0
      %343 = vmatpush1.msra.mxu0 %v284
      %344 = vmatprep.subr.mxu0 0.0
      %345 = vmatpush1.msra.mxu0 %v285
      %346 = vmatprep.subr.mxu0 0.0
      %347 = vmatpush1.msra.mxu0 %v286
      %348 = vmatprep.subr.mxu0 0.0
      %349 = vmatpush1.msra.mxu0 %v287
      %350 = vmatprep.subr.mxu0 0.0
      %351 = vmatpush1.msra.mxu0 %v288
      %352 = vmatprep.subr.mxu0 0.0
      %353 = vmatpush1.msra.mxu0 %v289
      %354 = vmatprep.subr.mxu0 0.0
      %355 = vmatpush1.msra.mxu0 %v290
      %356 = vmatprep.subr.mxu0 0.0
      %357 = vmatpush1.msra.mxu0 %v291
      %358 = vmatprep.subr.mxu0 0.0
      %359 = vmatpush1.msra.mxu0 %v292
      %360 = vmatprep.subr.mxu0 0.0
      %361 = vmatpush1.msra.mxu0 %v293
      %362 = vmatprep.subr.mxu0 0.0
      %363 = vmatpush1.msra.mxu0 %v294
      %364 = vmatprep.subr.mxu0 0.0
      %365 = vmatpush1.msra.mxu0 %v295
      %366 = vmatprep.subr.mxu0 0.0
      %367 = vmatpush1.msra.mxu0 %v296
      %368 = vmatprep.subr.mxu0 0.0
      %369 = vmatpush1.msra.mxu0 %v297
      %370 = vmatprep.subr.mxu0 0.0
      %371 = vmatpush1.msra.mxu0 %v298
      %372 = vmatprep.subr.mxu0 0.0
      %373 = vmatpush1.msra.mxu0 %v299
      %374 = vmatprep.subr.mxu0 0.0
      %375 = vmatpush1.msra.mxu0 %v300
      %376 = vmatprep.mubr.f32.mxu0 %v309
      %377 = vmatmul.mubr.f32.gmra.mrb[0].mxu0 %v305
      %v378 = vpop.f32.mrb[0].mxu0
      %v379 = vadd.f32 0.0, %v378
      %v380 = vpop.f32.mrb[0].mxu0
      %381 = vdwg.mxu0
      %v382 = vld [vmem:[%s3] sm:$0xff]
      %v383 = vld [vmem:[%s3 + $0x8] sm:$0xff]
      %v384 = vld [vmem:[%s3 + $0x10] sm:$0xff]
      %v385 = vld [vmem:[%s3 + $0x18] sm:$0xff]
      %v386 = vld [vmem:[%s3 + $0x20] sm:$0xff]
      %v387 = vld [vmem:[%s3 + $0x28] sm:$0xff]
      %v388 = vld [vmem:[%s3 + $0x30] sm:$0xff]
      %v389 = vld [vmem:[%s3 + $0x38] sm:$0xff]
      %v390 = vld [vmem:[%s3 + $0x40] sm:$0xff]
      %v391 = vld [vmem:[%s3 + $0x48] sm:$0xff]
      %v392 = vld [vmem:[%s3 + $0x50] sm:$0xff]
      %v393 = vld [vmem:[%s3 + $0x58] sm:$0xff]
      %v394 = vld [vmem:[%s3 + $0x60] sm:$0xff]
      %v395 = vld [vmem:[%s3 + $0x68] sm:$0xff]
      %v396 = vld [vmem:[%s3 + $0x70] sm:$0xff]
      %v397 = vld [vmem:[%s3 + $0x78] sm:$0xff]
      %v398 = vld [vmem:[%s3 + $0x80] sm:$0xff]
      %v399 = vld [vmem:[%s3 + $0x88] sm:$0xff]
      %v400 = vld [vmem:[%s3 + $0x90] sm:$0xff]
      %v401 = vld [vmem:[%s3 + $0x98] sm:$0xff]
      %v402 = vld [vmem:[%s3 + $0xa0] sm:$0xff]
      %v403 = vld [vmem:[%s3 + $0xa8] sm:$0xff]
      %v404 = vld [vmem:[%s3 + $0xb0] sm:$0xff]
      %v405 = vld [vmem:[%s3 + $0xb8] sm:$0xff]
      %v406 = vld [vmem:[%s3 + $0xc0] sm:$0xff]
      %v407 = vld [vmem:[%s3 + $0xc8] sm:$0xff]
      %v408 = vld [vmem:[%s3 + $0xd0] sm:$0xff]
      %v409 = vld [vmem:[%s3 + $0xd8] sm:$0xff]
      %v410 = vld [vmem:[%s3 + $0xe0] sm:$0xff]
      %v411 = vld [vmem:[%s3 + $0xe8] sm:$0xff]
      %v412 = vld [vmem:[%s3 + $0xf0] sm:$0xff]
      %v413 = vld [vmem:[%s3 + $0xf8] sm:$0xff]
      %v415 = vcombine.high %v268, %v268
      %417 = vmatprep.subr.mxu0 0.0
      %418 = vmatpush1.msra.mxu0 %v382
      %419 = vmatprep.subr.mxu0 0.0
      %420 = vmatpush1.msra.mxu0 %v383
      %421 = vmatprep.subr.mxu0 0.0
      %422 = vmatpush1.msra.mxu0 %v384
      %423 = vmatprep.subr.mxu0 0.0
      %424 = vmatpush1.msra.mxu0 %v385
      %425 = vmatprep.subr.mxu0 0.0
      %426 = vmatpush1.msra.mxu0 %v386
      %427 = vmatprep.subr.mxu0 0.0
      %428 = vmatpush1.msra.mxu0 %v387
      %429 = vmatprep.subr.mxu0 0.0
      %430 = vmatpush1.msra.mxu0 %v388
      %431 = vmatprep.subr.mxu0 0.0
      %432 = vmatpush1.msra.mxu0 %v389
      %433 = vmatprep.subr.mxu0 0.0
      %434 = vmatpush1.msra.mxu0 %v390
      %435 = vmatprep.subr.mxu0 0.0
      %436 = vmatpush1.msra.mxu0 %v391
      %437 = vmatprep.subr.mxu0 0.0
      %438 = vmatpush1.msra.mxu0 %v392
      %439 = vmatprep.subr.mxu0 0.0
      %440 = vmatpush1.msra.mxu0 %v393
      %441 = vmatprep.subr.mxu0 0.0
      %442 = vmatpush1.msra.mxu0 %v394
      %443 = vmatprep.subr.mxu0 0.0
      %444 = vmatpush1.msra.mxu0 %v395
      %445 = vmatprep.subr.mxu0 0.0
      %446 = vmatpush1.msra.mxu0 %v396
      %447 = vmatprep.subr.mxu0 0.0
      %448 = vmatpush1.msra.mxu0 %v397
      %449 = vmatprep.subr.mxu0 0.0
      %450 = vmatpush1.msra.mxu0 %v398
      %451 = vmatprep.subr.mxu0 0.0
      %452 = vmatpush1.msra.mxu0 %v399
      %453 = vmatprep.subr.mxu0 0.0
      %454 = vmatpush1.msra.mxu0 %v400
      %455 = vmatprep.subr.mxu0 0.0
      %456 = vmatpush1.msra.mxu0 %v401
      %457 = vmatprep.subr.mxu0 0.0
      %458 = vmatpush1.msra.mxu0 %v402
      %459 = vmatprep.subr.mxu0 0.0
      %460 = vmatpush1.msra.mxu0 %v403
      %461 = vmatprep.subr.mxu0 0.0
      %462 = vmatpush1.msra.mxu0 %v404
      %463 = vmatprep.subr.mxu0 0.0
      %464 = vmatpush1.msra.mxu0 %v405
      %465 = vmatprep.subr.mxu0 0.0
      %466 = vmatpush1.msra.mxu0 %v406
      %467 = vmatprep.subr.mxu0 0.0
      %468 = vmatpush1.msra.mxu0 %v407
      %469 = vmatprep.subr.mxu0 0.0
      %470 = vmatpush1.msra.mxu0 %v408
      %471 = vmatprep.subr.mxu0 0.0
      %472 = vmatpush1.msra.mxu0 %v409
      %473 = vmatprep.subr.mxu0 0.0
      %474 = vmatpush1.msra.mxu0 %v410
      %475 = vmatprep.subr.mxu0 0.0
      %476 = vmatpush1.msra.mxu0 %v411
      %477 = vmatprep.subr.mxu0 0.0
      %478 = vmatpush1.msra.mxu0 %v412
      %479 = vmatprep.subr.mxu0 0.0
      %480 = vmatpush1.msra.mxu0 %v413
      %481 = vmatprep.mubr.f32.mxu0 %v415
      %482 = vmatmul.mubr.f32.gmra.mrb[0].mxu0 %v268
      %v483 = vpop.f32.mrb[0].mxu0
      %v484 = vadd.f32 0.0, %v483
      %v485 = vpop.f32.mrb[0].mxu0
      %486 = vdwg.mxu0
      %v487 = vlaneseq
      %v488 = vshrl.u32 %v487, 7
      %v489 = vsub.s32 0, %v488
      %v490 = vrot.slane %v379, %v489
      %v491 = vadd.f32 %v484, %v490
      %v492 = vld [vmem:[%s4] sm:$0xff]
      %v493 = vld [vmem:[%s4 + $0x8] sm:$0xff]
      %v494 = vld [vmem:[%s4 + $0x10] sm:$0xff]
      %v495 = vld [vmem:[%s4 + $0x18] sm:$0xff]
      %v496 = vld [vmem:[%s4 + $0x20] sm:$0xff]
      %v497 = vld [vmem:[%s4 + $0x28] sm:$0xff]
      %v498 = vld [vmem:[%s4 + $0x30] sm:$0xff]
      %v499 = vld [vmem:[%s4 + $0x38] sm:$0xff]
      %v500 = vld [vmem:[%s4 + $0x40] sm:$0xff]
      %v501 = vld [vmem:[%s4 + $0x48] sm:$0xff]
      %v502 = vld [vmem:[%s4 + $0x50] sm:$0xff]
      %v503 = vld [vmem:[%s4 + $0x58] sm:$0xff]
      %v504 = vld [vmem:[%s4 + $0x60] sm:$0xff]
      %v505 = vld [vmem:[%s4 + $0x68] sm:$0xff]
      %v506 = vld [vmem:[%s4 + $0x70] sm:$0xff]
      %v507 = vld [vmem:[%s4 + $0x78] sm:$0xff]
      %508 = vmatprep.subr.mxu0 0.0
      %509 = vmatpush1.msra.mxu0 %v492
      %510 = vmatprep.subr.mxu0 0.0
      %511 = vmatpush1.msra.mxu0 %v493
      %512 = vmatprep.subr.mxu0 0.0
      %513 = vmatpush1.msra.mxu0 %v494
      %514 = vmatprep.subr.mxu0 0.0
      %515 = vmatpush1.msra.mxu0 %v495
      %516 = vmatprep.subr.mxu0 0.0
      %517 = vmatpush1.msra.mxu0 %v496
      %518 = vmatprep.subr.mxu0 0.0
      %519 = vmatpush1.msra.mxu0 %v497
      %520 = vmatprep.subr.mxu0 0.0
      %521 = vmatpush1.msra.mxu0 %v498
      %522 = vmatprep.subr.mxu0 0.0
      %523 = vmatpush1.msra.mxu0 %v499
      %524 = vmatprep.subr.mxu0 0.0
      %525 = vmatpush1.msra.mxu0 %v500
      %526 = vmatprep.subr.mxu0 0.0
      %527 = vmatpush1.msra.mxu0 %v501
      %528 = vmatprep.subr.mxu0 0.0
      %529 = vmatpush1.msra.mxu0 %v502
      %530 = vmatprep.subr.mxu0 0.0
      %531 = vmatpush1.msra.mxu0 %v503
      %532 = vmatprep.subr.mxu0 0.0
      %533 = vmatpush1.msra.mxu0 %v504
      %534 = vmatprep.subr.mxu0 0.0
      %535 = vmatpush1.msra.mxu0 %v505
      %536 = vmatprep.subr.mxu0 0.0
      %537 = vmatpush1.msra.mxu0 %v506
      %538 = vmatprep.subr.mxu0 0.0
      %539 = vmatpush1.msra.mxu0 %v507
      %540 = vmatprep.subr.mxu0 0.0
      %541 = vmatpush1.msra.mxu0 0.0
      %542 = vmatprep.subr.mxu0 0.0
      %543 = vmatpush1.msra.mxu0 0.0
      %544 = vmatprep.subr.mxu0 0.0
      %545 = vmatpush1.msra.mxu0 0.0
      %546 = vmatprep.subr.mxu0 0.0
      %547 = vmatpush1.msra.mxu0 0.0
      %548 = vmatprep.subr.mxu0 0.0
      %549 = vmatpush1.msra.mxu0 0.0
      %550 = vmatprep.subr.mxu0 0.0
      %551 = vmatpush1.msra.mxu0 0.0
      %552 = vmatprep.subr.mxu0 0.0
      %553 = vmatpush1.msra.mxu0 0.0
      %554 = vmatprep.subr.mxu0 0.0
      %555 = vmatpush1.msra.mxu0 0.0
      %556 = vmatprep.subr.mxu0 0.0
      %557 = vmatpush1.msra.mxu0 0.0
      %558 = vmatprep.subr.mxu0 0.0
      %559 = vmatpush1.msra.mxu0 0.0
      %560 = vmatprep.subr.mxu0 0.0
      %561 = vmatpush1.msra.mxu0 0.0
      %562 = vmatprep.subr.mxu0 0.0
      %563 = vmatpush1.msra.mxu0 0.0
      %564 = vmatprep.subr.mxu0 0.0
      %565 = vmatpush1.msra.mxu0 0.0
      %566 = vmatprep.subr.mxu0 0.0
      %567 = vmatpush1.msra.mxu0 0.0
      %568 = vmatprep.subr.mxu0 0.0
      %569 = vmatpush1.msra.mxu0 0.0
      %570 = vmatprep.subr.mxu0 0.0
      %571 = vmatpush1.msra.mxu0 0.0
      %572 = vmatprep.mubr.f32.mxu0 0.0
      %573 = vmatmul.mubr.f32.gmra.mrb[0].mxu0 %v491
      %v574 = vpop.f32.mrb[0].mxu0
      %v575 = vadd.f32 0.0, %v574
      %v576 = vpop.f32.mrb[0].mxu0
      %577 = vdwg.mxu0
      %v578 = vmax.f32 %v575, 0.0
      %v579 = vld [vmem:[%s5] sm:$0xff]
      %v580 = vld [vmem:[%s5 + $0x8] sm:$0xff]
      %v581 = vld [vmem:[%s5 + $0x10] sm:$0xff]
      %v582 = vld [vmem:[%s5 + $0x18] sm:$0xff]
      %vm583 = vcmask 261120
      %v585 = vsel %vm583, %v578, 0
      %587 = vmatprep.subr.mxu0 0.0
      %588 = vmatpush1.msra.mxu0 %v579
      %589 = vmatprep.subr.mxu0 0.0
      %590 = vmatpush1.msra.mxu0 %v580
      %591 = vmatprep.subr.mxu0 0.0
      %592 = vmatpush1.msra.mxu0 %v581
      %593 = vmatprep.subr.mxu0 0.0
      %594 = vmatpush1.msra.mxu0 %v582
      %595 = vmatprep.subr.mxu0 0.0
      %596 = vmatpush1.msra.mxu0 0.0
      %597 = vmatprep.subr.mxu0 0.0
      %598 = vmatpush1.msra.mxu0 0.0
      %599 = vmatprep.subr.mxu0 0.0
      %600 = vmatpush1.msra.mxu0 0.0
      %601 = vmatprep.subr.mxu0 0.0
      %602 = vmatpush1.msra.mxu0 0.0
      %603 = vmatprep.subr.mxu0 0.0
      %604 = vmatpush1.msra.mxu0 0.0
      %605 = vmatprep.subr.mxu0 0.0
      %606 = vmatpush1.msra.mxu0 0.0
      %607 = vmatprep.subr.mxu0 0.0
      %608 = vmatpush1.msra.mxu0 0.0
      %609 = vmatprep.subr.mxu0 0.0
      %610 = vmatpush1.msra.mxu0 0.0
      %611 = vmatprep.subr.mxu0 0.0
      %612 = vmatpush1.msra.mxu0 0.0
      %613 = vmatprep.subr.mxu0 0.0
      %614 = vmatpush1.msra.mxu0 0.0
      %615 = vmatprep.subr.mxu0 0.0
      %616 = vmatpush1.msra.mxu0 0.0
      %617 = vmatprep.subr.mxu0 0.0
      %618 = vmatpush1.msra.mxu0 0.0
      %619 = vmatprep.subr.mxu0 0.0
      %620 = vmatpush1.msra.mxu0 0.0
      %621 = vmatprep.subr.mxu0 0.0
      %622 = vmatpush1.msra.mxu0 0.0
      %623 = vmatprep.subr.mxu0 0.0
      %624 = vmatpush1.msra.mxu0 0.0
      %625 = vmatprep.subr.mxu0 0.0
      %626 = vmatpush1.msra.mxu0 0.0
      %627 = vmatprep.subr.mxu0 0.0
      %628 = vmatpush1.msra.mxu0 0.0
      %629 = vmatprep.subr.mxu0 0.0
      %630 = vmatpush1.msra.mxu0 0.0
      %631 = vmatprep.subr.mxu0 0.0
      %632 = vmatpush1.msra.mxu0 0.0
      %633 = vmatprep.subr.mxu0 0.0
      %634 = vmatpush1.msra.mxu0 0.0
      %635 = vmatprep.subr.mxu0 0.0
      %636 = vmatpush1.msra.mxu0 0.0
      %637 = vmatprep.subr.mxu0 0.0
      %638 = vmatpush1.msra.mxu0 0.0
      %639 = vmatprep.subr.mxu0 0.0
      %640 = vmatpush1.msra.mxu0 0.0
      %641 = vmatprep.subr.mxu0 0.0
      %642 = vmatpush1.msra.mxu0 0.0
      %643 = vmatprep.subr.mxu0 0.0
      %644 = vmatpush1.msra.mxu0 0.0
      %645 = vmatprep.subr.mxu0 0.0
      %646 = vmatpush1.msra.mxu0 0.0
      %647 = vmatprep.subr.mxu0 0.0
      %648 = vmatpush1.msra.mxu0 0.0
      %649 = vmatprep.subr.mxu0 0.0
      %650 = vmatpush1.msra.mxu0 0.0
      %651 = vmatprep.mubr.f32.mxu0 0.0
      %652 = vmatmul.mubr.f32.gmra.mrb[0].mxu0 %v585
      %v653 = vpop.f32.mrb[0].mxu0
      %v654 = vadd.f32 0.0, %v653
      %v655 = vpop.f32.mrb[0].mxu0
      %656 = vdwg.mxu0
      %v657 = vxor.u32 %v654, 2147483648
      %v658 = vmul.f32 %v657, 1.442695
      %v659 = vpow.pop %v658
      %v660 = vadd.f32 %v659, 1.0
      %v661 = vrcp.pop %v660
      %v662 = vmul.f32 1.0, %v661
      %v663 = vmul.f32 %v662, %v490
      %v664 = vadd.f32 %v484, %v663
      %665 = vst [vmem:[%s266] sm:$0xf] %v664
      %p666 = scmp.lt.s32.totalorder %s17, 1
      %s667 = scalar_select %p666, %s17, 1
      %s668 = smul.addr %s667, 4
      %s669 = scalar_lea.vmem %s6, %s668
      // Predicated region
      $region45: #{gf_block_forward.1} parent=43 // pred_check
        %p670 = pneg %p171
      $region46: #{gf_block_forward.1} parent=43 // pred_check_branch
        %672 = sbr.rel (%p670) target = $region48
      $region47: #{gf_block_forward.1} parent=43 // pred_region
        _
      $region48: #{gf_block_forward.1} parent=43 // pred_fallthru
        _
    $region44: #{gf_block_forward.1} parent=5 // pred_fallthru
      _
    %p673 = scmp.le.s32.totalorder 2, %s12
    // Predicated region
    $region49: #{gf_block_forward.1} parent=5 // pred_check
      %p674 = pneg %p673
    $region50: #{gf_block_forward.1} parent=5 // pred_check_branch
      %676 = sbr.rel (%p674) target = $region52
    $region51: #{gf_block_forward.1} parent=5 // pred_region
      %s677 = ssub.s32 %s12, 2
      // Predicated region
      $region53: #{gf_block_forward.1} parent=51 // pred_check
        %p678 = pneg %p177
      $region54: #{gf_block_forward.1} parent=51 // pred_check_branch
        %680 = sbr.rel (%p678) target = $region56
      $region55: #{gf_block_forward.1} parent=51 // pred_region
        %p681 = scmp.lt.s32.totalorder %s18, 1
        %s682 = scalar_select %p681, %s18, 1
        %s683 = smul.addr %s682, 4
        %s684 = scalar_lea.vmem %s6, %s683
      $region56: #{gf_block_forward.1} parent=51 // pred_fallthru
        _
    $region52: #{gf_block_forward.1} parent=5 // pred_fallthru
      _
  $region6: #{gf_block_forward.1} parent=0 // loop_footer
    %s16 = sadd.s32 1, %s12
  $region7: #{gf_block_forward.1} parent=0 // loop_footer_branch
    %11 = sbr.rel target = $region3
  $region8: #{gf_block_forward.1} parent=0 // loop_exit
    _

</llo_original>
